<compile_context>
chip_gen: v7x
topology: tpu7x:2x2x1
jax: 0.10.0
libtpu: 0.0.40
codegen_flags: <defaults>
</compile_context>

<pallas_src>
import math

import jax
import jax.numpy as jnp
from jax.experimental import pallas as pl
from jax.experimental.pallas import tpu as pltpu

_HAS_BUFFERED = hasattr(pl, "Buffered")


# ----------------------------------------------------------------------------
# Helpers
# ----------------------------------------------------------------------------
def _round_up(n, m):
    return ((n + m - 1) // m) * m


def _pad2d(a, rows, cols):
    return jnp.pad(a, ((0, rows - a.shape[0]), (0, cols - a.shape[1])))


# ----------------------------------------------------------------------------
# Kernel
# ----------------------------------------------------------------------------
def _make_kernel(latent, real_batch, batch_tile):
    """latent / real_batch / batch_tile are compile-time Python ints."""

    def kernel(x_ref, eps_ref,
               w1_ref, b1_ref, w2_ref, b2_ref, w3_ref, b3_ref,
               w45_ref, b45_ref,
               z_ref, kl_ref):
        x = x_ref[...]  # already in matmul operand dtype (bf16 or f32)

        # --- three ReLU(Linear) layers: MXU matmuls, f32 accumulation ---
        h = jnp.dot(x, w1_ref[...], preferred_element_type=jnp.float32) + b1_ref[...]
        h = jnp.maximum(h, 0.0)
        h = jnp.dot(h.astype(w2_ref.dtype), w2_ref[...],
                    preferred_element_type=jnp.float32) + b2_ref[...]
        h = jnp.maximum(h, 0.0)
        h = jnp.dot(h.astype(w3_ref.dtype), w3_ref[...],
                    preferred_element_type=jnp.float32) + b3_ref[...]
        h = jnp.maximum(h, 0.0)

        # --- fused heads: lanes [0,L) = mu, lanes [L,2L) = s = log(sigma) ---
        head = jnp.dot(h.astype(w45_ref.dtype), w45_ref[...],
                       preferred_element_type=jnp.float32) + b45_ref[...]

        lane = jax.lax.broadcasted_iota(jnp.int32, head.shape, 1)
        mu_lanes = lane < latent
        s_lanes = (lane >= latent) & (lane < 2 * latent)

        # exp only where s lives so padded / mu lanes can never overflow.
        sigma = jnp.exp(jnp.where(s_lanes, head, 0.0))

        # Reparameterisation, stored "split": lanes [0,L) carry mu, lanes
        # [L,2L) carry sigma*eps (eps was placed on the s-lanes host-side);
        # the wrapper adds the two (B, L) lane groups. Store stays 128-lane
        # dense (no vst.msk).
        zc = jnp.where(mu_lanes, head, 0.0) + sigma * eps_ref[...]
        z_ref[...] = zc.astype(z_ref.dtype)

        # --- in-kernel KL partial sum for this batch tile ---
        # kl_elem = sigma^2 + mu^2 - log(sigma) - 1/2, using s directly
        # (never log(exp(s))). Padded lanes and padded rows are masked out.
        row = (jax.lax.broadcasted_iota(jnp.int32, head.shape, 0)
               + pl.program_id(0) * batch_tile)
        rows_ok = row < real_batch
        kl_elems = (jnp.where(mu_lanes & rows_ok, head * head, 0.0)
                    + jnp.where(s_lanes & rows_ok,
                                sigma * sigma - head - 0.5, 0.0))
        kl_ref[...] = jnp.zeros(kl_ref.shape, jnp.float32) + jnp.sum(kl_elems)

    return kernel


# ----------------------------------------------------------------------------
# Parameter preparation (hoisted out of the hot path: pad + fuse + cast once)
# ----------------------------------------------------------------------------
def prepare_encoder_params(params, *, use_bf16=True):
    (w1, b1, w2, b2, w3, b3, w4, b4, w5, b5) = params
    input_dims, hidden_dims = w1.shape
    latent_dims = w4.shape[1]

    d_pad = _round_up(input_dims, 128)
    h_pad = _round_up(hidden_dims, 128)
    head_pad = _round_up(2 * latent_dims, 128)

    # Fused heads: columns [0,L) = mu head, [L,2L) = log-sigma head.
    w45 = jnp.concatenate([w4, w5], axis=1)
    b45 = jnp.concatenate([b4, b5], axis=1)

    wdt = jnp.bfloat16 if use_bf16 else jnp.float32
    weights = (
        _pad2d(w1, d_pad, h_pad).astype(wdt),
        _pad2d(b1, 1, h_pad).astype(jnp.float32),
        _pad2d(w2, h_pad, h_pad).astype(wdt),
        _pad2d(b2, 1, h_pad).astype(jnp.float32),
        _pad2d(w3, h_pad, h_pad).astype(wdt),
        _pad2d(b3, 1, h_pad).astype(jnp.float32),
        _pad2d(w45, h_pad, head_pad).astype(wdt),
        _pad2d(b45, 1, head_pad).astype(jnp.float32),
    )
    dims = dict(input_dims=input_dims, hidden_dims=hidden_dims,
                latent_dims=latent_dims, d_pad=d_pad, h_pad=h_pad,
                head_pad=head_pad, use_bf16=use_bf16)
    return weights, dims


def _choose_batch_tile(batch, max_batch_tile):
    if batch <= 16:
        return batch  # single full-extent block, no row padding at all
    # >= 2 grid steps so ("parallel",) shards across v7x's two TensorCores;
    # tiles rounded to the 8-sublane granule, capped at max_batch_tile so large
    # batches amortize the ~0.35us per-grid-step overhead with big tiles.
    return min(max_batch_tile, _round_up(-(-batch // 2), 8))


# ----------------------------------------------------------------------------
# Forward wrapper
# ----------------------------------------------------------------------------
def variational_encoder_forward(x_nchw, eps, prepared, *,
                                max_batch_tile=512,
                                single_buffer_weights=True):
    """Returns (z, kl) like the PyTorch module (z returned, kl stored)."""
    weights, dims = prepared
    lat = dims["latent_dims"]
    d_in = dims["input_dims"]
    d_pad, h_pad, head_pad = dims["d_pad"], dims["h_pad"], dims["head_pad"]

    batch = x_nchw.shape[0]
    xf = x_nchw.reshape(batch, -1)                 # torch.flatten(x, 1)
    assert xf.shape[1] == d_in, (xf.shape, d_in)
    xf = xf.astype(jnp.bfloat16 if dims["use_bf16"] else jnp.float32)

    batch_tile = _choose_batch_tile(batch, max_batch_tile)
    b_pad = _round_up(batch, batch_tile)
    n_tiles = b_pad // batch_tile

    # Only pad activations when the shape actually requires it.
    if (b_pad, d_pad) != xf.shape:
        xf = jnp.pad(xf, ((0, b_pad - batch), (0, d_pad - d_in)))
    # eps goes on the log-sigma lanes [L, 2L) so sigma*eps lands there directly.
    eps_p = jnp.pad(eps.astype(jnp.float32),
                    ((0, b_pad - batch), (lat, head_pad - 2 * lat)))

    row_map = lambda i: (i, 0)
    const_map = lambda i: (0, 0)

    def weight_spec(shape):
        if single_buffer_weights and _HAS_BUFFERED:
            # Constant block every grid step -> one VMEM buffer is enough
            # (halves weight residency; matters on v7x's 64 MiB VMEM).
            return pl.BlockSpec(shape, const_map, pipeline_mode=pl.Buffered(1))
        return pl.BlockSpec(shape, const_map)

    w1p, b1p, w2p, b2p, w3p, b3p, w45p, b45p = weights
    in_specs = [
        pl.BlockSpec((batch_tile, d_pad), row_map),
        pl.BlockSpec((batch_tile, head_pad), row_map),
        weight_spec((d_pad, h_pad)), weight_spec((1, h_pad)),
        weight_spec((h_pad, h_pad)), weight_spec((1, h_pad)),
        weight_spec((h_pad, h_pad)), weight_spec((1, h_pad)),
        weight_spec((h_pad, head_pad)), weight_spec((1, head_pad)),
    ]
    out_specs = (
        pl.BlockSpec((batch_tile, head_pad), row_map),
        pl.BlockSpec((1, 8, 128), lambda i: (i, 0, 0)),
    )
    out_shape = (
        jax.ShapeDtypeStruct((b_pad, head_pad), jnp.float32),
        jax.ShapeDtypeStruct((n_tiles, 8, 128), jnp.float32),
    )

    operands = (xf, eps_p, w1p, b1p, w2p, b2p, w3p, b3p, w45p, b45p)

    # Advisory cost estimate so XLA schedules around the fused custom call.
    flops = 2 * b_pad * (d_pad * h_pad + 2 * h_pad * h_pad + h_pad * head_pad)
    bytes_accessed = int(sum(int(a.size) * a.dtype.itemsize for a in operands)
                         + b_pad * head_pad * 4 + n_tiles * 8 * 128 * 4)
    cost = pl.CostEstimate(flops=int(flops),
                           transcendentals=int(b_pad * head_pad),
                           bytes_accessed=bytes_accessed)

    # VMEM plan sized from the actual blocks; clamped to a v7x-safe ceiling.
    block_bytes = (batch_tile * d_pad * xf.dtype.itemsize
                   + 2 * batch_tile * head_pad * 4          # eps + z tiles
                   + 8 * 128 * 4                            # kl tile
                   + sum(int(w.size) * w.dtype.itemsize for w in weights))
    vmem_limit = int(max(16 << 20, min(3 * block_bytes + (4 << 20), 56 << 20)))

    z_split, kl_part = pl.pallas_call(
        _make_kernel(lat, batch, batch_tile),
        out_shape=out_shape,
        grid=(n_tiles,),
        in_specs=in_specs,
        out_specs=out_specs,
        compiler_params=pltpu.CompilerParams(
            dimension_semantics=("parallel",),   # batch axis -> both v7x TCs
            vmem_limit_bytes=vmem_limit,
        ),
        cost_estimate=cost,
    )(*operands)

    # Recombine the split z lanes: [0,L) = mu, [L,2L) = sigma*eps (tiny add).
    z = z_split[:batch, :lat] + z_split[:batch, lat:2 * lat]
    kl = jnp.sum(kl_part[:, 0, 0])
    return z, kl


# ----------------------------------------------------------------------------
# Parameter init (nn.Linear default: U[-1/sqrt(fan_in), 1/sqrt(fan_in)]);
# weights stored as (fan_in, fan_out) so the kernel computes x @ W + b.
# ----------------------------------------------------------------------------
def init_params(key, input_dims, hidden_dims, latent_dims):
    def linear(k, fan_in, fan_out):
        kw, kb = jax.random.split(k)
        bound = 1.0 / math.sqrt(fan_in)
        w = jax.random.uniform(kw, (fan_in, fan_out), jnp.float32, -bound, bound)
        b = jax.random.uniform(kb, (1, fan_out), jnp.float32, -bound, bound)
        return w, b

    ks = jax.random.split(key, 5)
    w1, b1 = linear(ks[0], input_dims, hidden_dims)
    w2, b2 = linear(ks[1], hidden_dims, hidden_dims)
    w3, b3 = linear(ks[2], hidden_dims, hidden_dims)
    w4, b4 = linear(ks[3], hidden_dims, latent_dims)
    w5, b5 = linear(ks[4], hidden_dims, latent_dims)
    return (w1, b1, w2, b2, w3, b3, w4, b4, w5, b5)


def reference_forward(x_nchw, eps, params):
    """Pure-JAX reference of VariationalEncoder.forward for validation."""
    (w1, b1, w2, b2, w3, b3, w4, b4, w5, b5) = params
    x = x_nchw.reshape(x_nchw.shape[0], -1)
    h = jax.nn.relu(x @ w1 + b1)
    h = jax.nn.relu(h @ w2 + b2)
    h = jax.nn.relu(h @ w3 + b3)
    mu = h @ w4 + b4
    s = h @ w5 + b5
    sigma = jnp.exp(s)
    z = mu + sigma * eps
    kl = jnp.sum(sigma ** 2 + mu ** 2 - s - 0.5)   # log(sigma) == s, exact
    return z, kl


# ----------------------------------------------------------------------------
# Demo / validation
# ----------------------------------------------------------------------------
if __name__ == "__main__":
    C, Hs, Ws = 4, 16, 16
    input_dims, hidden_dims, latent_dims = C * Hs * Ws, 128, 32

    keys = jax.random.split(jax.random.PRNGKey(0), 8)
    kp, kx1, ke1, kx2, ke2, kp3, kx3, ke3 = keys
    params = init_params(kp, input_dims, hidden_dims, latent_dims)

    # --- Test 1: small batch (2,4,16,16), exact f32 path, single grid step ---
    B1 = 2
    x1 = jax.random.normal(kx1, (B1, C, Hs, Ws), jnp.float32)
    eps1 = jax.random.normal(ke1, (B1, latent_dims), jnp.float32)
    prep_f32 = prepare_encoder_params(params, use_bf16=False)
    z1, kl1 = jax.block_until_ready(variational_encoder_forward(x1, eps1, prep_f32))
    z1_ref, kl1_ref = reference_forward(x1, eps1, params)
    assert z1.shape == (B1, latent_dims), z1.shape
    assert jnp.allclose(z1, z1_ref, atol=1e-4, rtol=1e-4), "z mismatch (f32, B=2)"
    assert jnp.allclose(kl1, kl1_ref, atol=1e-2, rtol=1e-4), "kl mismatch (f32, B=2)"

    # --- Test 2: bigger batch, default bf16 operands, 2 grid steps + row pad ---
    # (bf16 matmul noise is amplified by sigma^2 in KL; tolerances documented)
    B2 = 300
    x2 = jax.random.normal(kx2, (B2, C, Hs, Ws), jnp.float32)
    eps2 = jax.random.normal(ke2, (B2, latent_dims), jnp.float32)
    prep_bf16 = prepare_encoder_params(params, use_bf16=True)
    z2, kl2 = jax.block_until_ready(variational_encoder_forward(x2, eps2, prep_bf16))
    z2_ref, kl2_ref = reference_forward(x2, eps2, params)
    assert z2.shape == (B2, latent_dims), z2.shape
    assert jnp.allclose(z2, z2_ref, atol=0.1, rtol=0.1), "z mismatch (bf16, B=300)"
    assert jnp.allclose(kl2, kl2_ref, atol=2.0, rtol=0.05), "kl mismatch (bf16, B=300)"

    # --- Test 3: non-128-aligned dims exercise padding + lane/row masks (f32) ---
    idims, hdims, ldims = 3 * 10 * 10, 100, 20
    params3 = init_params(kp3, idims, hdims, ldims)
    B3 = 5
    x3 = jax.random.normal(kx3, (B3, 3, 10, 10), jnp.float32)
    eps3 = jax.random.normal(ke3, (B3, ldims), jnp.float32)
    prep3 = prepare_encoder_params(params3, use_bf16=False)
    z3, kl3 = jax.block_until_ready(variational_encoder_forward(x3, eps3, prep3))
    z3_ref, kl3_ref = reference_forward(x3, eps3, params3)
    assert z3.shape == (B3, ldims), z3.shape
    assert jnp.allclose(z3, z3_ref, atol=1e-4, rtol=1e-4), "z mismatch (odd dims)"
    assert jnp.allclose(kl3, kl3_ref, atol=1e-2, rtol=1e-4), "kl mismatch (odd dims)"

    print("KERNEL_OK")
</pallas_src>

<mosaic_0001>
module attributes {stable_mosaic.version = 11 : i64} {
  func.func @kernel(%arg0: i32, %arg1: memref<2x1024xf32, #tpu.memory_space<vmem>>, %arg2: memref<2x128xf32, #tpu.memory_space<vmem>>, %arg3: memref<1024x128xf32, #tpu.memory_space<vmem>>, %arg4: memref<1x128xf32, #tpu.memory_space<vmem>>, %arg5: memref<128x128xf32, #tpu.memory_space<vmem>>, %arg6: memref<1x128xf32, #tpu.memory_space<vmem>>, %arg7: memref<128x128xf32, #tpu.memory_space<vmem>>, %arg8: memref<1x128xf32, #tpu.memory_space<vmem>>, %arg9: memref<128x128xf32, #tpu.memory_space<vmem>>, %arg10: memref<1x128xf32, #tpu.memory_space<vmem>>, %arg11: memref<2x128xf32, #tpu.memory_space<vmem>>, %arg12: memref<1x8x128xf32, #tpu.memory_space<vmem>>) attributes {dimension_semantics = [#tpu.dimension_semantics<parallel>], iteration_bounds = array<i64: 1>, scalar_prefetch = 0 : i64, scratch_operands = 0 : i64, tpu.core_type = #tpu.core_type<tc>, window_params = [{transform_indices = @transform_0, window_bounds = array<i64: 2, 1024>}, {transform_indices = @transform_1, window_bounds = array<i64: 2, 128>}, {pipeline_mode = #tpu.pipeline_mode<synchronous>, transform_indices = @transform_2, window_bounds = array<i64: 1024, 128>}, {pipeline_mode = #tpu.pipeline_mode<synchronous>, transform_indices = @transform_3, window_bounds = array<i64: 1, 128>}, {pipeline_mode = #tpu.pipeline_mode<synchronous>, transform_indices = @transform_4, window_bounds = array<i64: 128, 128>}, {pipeline_mode = #tpu.pipeline_mode<synchronous>, transform_indices = @transform_5, window_bounds = array<i64: 1, 128>}, {pipeline_mode = #tpu.pipeline_mode<synchronous>, transform_indices = @transform_6, window_bounds = array<i64: 128, 128>}, {pipeline_mode = #tpu.pipeline_mode<synchronous>, transform_indices = @transform_7, window_bounds = array<i64: 1, 128>}, {pipeline_mode = #tpu.pipeline_mode<synchronous>, transform_indices = @transform_8, window_bounds = array<i64: 128, 128>}, {pipeline_mode = #tpu.pipeline_mode<synchronous>, transform_indices = @transform_9, window_bounds = array<i64: 1, 128>}, {transform_indices = @transform_10, window_bounds = array<i64: 2, 128>}, {transform_indices = @transform_11, window_bounds = array<i64: 1, 8, 128>}]} {
    %c0 = arith.constant 0 : index
    %c0_0 = arith.constant 0 : index
    %0 = vector.load %arg1[%c0, %c0_0] : memref<2x1024xf32, #tpu.memory_space<vmem>>, vector<2x1024xf32>
    %c0_1 = arith.constant 0 : index
    %c0_2 = arith.constant 0 : index
    %1 = vector.load %arg3[%c0_1, %c0_2] : memref<1024x128xf32, #tpu.memory_space<vmem>>, vector<1024x128xf32>
    %cst = arith.constant dense<0.000000e+00> : vector<2x128xf32>
    %2 = tpu.matmul %0, %1, %cst {dimension_numbers = #tpu.dot_dimension_numbers<[1], [0], [0], [1], [0, 0, 1, 1], [], []>} : vector<2x1024xf32>, vector<1024x128xf32>, vector<2x128xf32> -> vector<2x128xf32>
    %c0_3 = arith.constant 0 : index
    %c0_4 = arith.constant 0 : index
    %3 = vector.load %arg4[%c0_3, %c0_4] : memref<1x128xf32, #tpu.memory_space<vmem>>, vector<1x128xf32>
    %4 = vector.broadcast %3 : vector<1x128xf32> to vector<2x128xf32>
    %5 = arith.addf %2, %4 : vector<2x128xf32>
    %cst_5 = arith.constant 0.000000e+00 : f32
    %6 = vector.broadcast %cst_5 : f32 to vector<2x128xf32>
    %7 = arith.maximumf %5, %6 : vector<2x128xf32>
    %c0_6 = arith.constant 0 : index
    %c0_7 = arith.constant 0 : index
    %8 = vector.load %arg5[%c0_6, %c0_7] : memref<128x128xf32, #tpu.memory_space<vmem>>, vector<128x128xf32>
    %cst_8 = arith.constant dense<0.000000e+00> : vector<2x128xf32>
    %9 = tpu.matmul %7, %8, %cst_8 {dimension_numbers = #tpu.dot_dimension_numbers<[1], [0], [0], [1], [0, 0, 1, 1], [], []>} : vector<2x128xf32>, vector<128x128xf32>, vector<2x128xf32> -> vector<2x128xf32>
    %c0_9 = arith.constant 0 : index
    %c0_10 = arith.constant 0 : index
    %10 = vector.load %arg6[%c0_9, %c0_10] : memref<1x128xf32, #tpu.memory_space<vmem>>, vector<1x128xf32>
    %11 = vector.broadcast %10 : vector<1x128xf32> to vector<2x128xf32>
    %12 = arith.addf %9, %11 : vector<2x128xf32>
    %cst_11 = arith.constant 0.000000e+00 : f32
    %13 = vector.broadcast %cst_11 : f32 to vector<2x128xf32>
    %14 = arith.maximumf %12, %13 : vector<2x128xf32>
    %c0_12 = arith.constant 0 : index
    %c0_13 = arith.constant 0 : index
    %15 = vector.load %arg7[%c0_12, %c0_13] : memref<128x128xf32, #tpu.memory_space<vmem>>, vector<128x128xf32>
    %cst_14 = arith.constant dense<0.000000e+00> : vector<2x128xf32>
    %16 = tpu.matmul %14, %15, %cst_14 {dimension_numbers = #tpu.dot_dimension_numbers<[1], [0], [0], [1], [0, 0, 1, 1], [], []>} : vector<2x128xf32>, vector<128x128xf32>, vector<2x128xf32> -> vector<2x128xf32>
    %c0_15 = arith.constant 0 : index
    %c0_16 = arith.constant 0 : index
    %17 = vector.load %arg8[%c0_15, %c0_16] : memref<1x128xf32, #tpu.memory_space<vmem>>, vector<1x128xf32>
    %18 = vector.broadcast %17 : vector<1x128xf32> to vector<2x128xf32>
    %19 = arith.addf %16, %18 : vector<2x128xf32>
    %cst_17 = arith.constant 0.000000e+00 : f32
    %20 = vector.broadcast %cst_17 : f32 to vector<2x128xf32>
    %21 = arith.maximumf %19, %20 : vector<2x128xf32>
    %c0_18 = arith.constant 0 : index
    %c0_19 = arith.constant 0 : index
    %22 = vector.load %arg9[%c0_18, %c0_19] : memref<128x128xf32, #tpu.memory_space<vmem>>, vector<128x128xf32>
    %cst_20 = arith.constant dense<0.000000e+00> : vector<2x128xf32>
    %23 = tpu.matmul %21, %22, %cst_20 {dimension_numbers = #tpu.dot_dimension_numbers<[1], [0], [0], [1], [0, 0, 1, 1], [], []>} : vector<2x128xf32>, vector<128x128xf32>, vector<2x128xf32> -> vector<2x128xf32>
    %c0_21 = arith.constant 0 : index
    %c0_22 = arith.constant 0 : index
    %24 = vector.load %arg10[%c0_21, %c0_22] : memref<1x128xf32, #tpu.memory_space<vmem>>, vector<1x128xf32>
    %25 = vector.broadcast %24 : vector<1x128xf32> to vector<2x128xf32>
    %26 = arith.addf %23, %25 : vector<2x128xf32>
    %27 = tpu.iota {dimensions = array<i32: 1>} : vector<2x128xi32>
    %c32_i32 = arith.constant 32 : i32
    %28 = vector.broadcast %c32_i32 : i32 to vector<2x128xi32>
    %29 = arith.cmpi slt, %27, %28 : vector<2x128xi32>
    %c32_i32_23 = arith.constant 32 : i32
    %30 = vector.broadcast %c32_i32_23 : i32 to vector<2x128xi32>
    %31 = arith.cmpi sge, %27, %30 : vector<2x128xi32>
    %c64_i32 = arith.constant 64 : i32
    %32 = vector.broadcast %c64_i32 : i32 to vector<2x128xi32>
    %33 = arith.cmpi slt, %27, %32 : vector<2x128xi32>
    %34 = arith.andi %31, %33 : vector<2x128xi1>
    %cst_24 = arith.constant 0.000000e+00 : f32
    %35 = vector.broadcast %cst_24 : f32 to vector<2x128xf32>
    %36 = arith.select %34, %26, %35 : vector<2x128xi1>, vector<2x128xf32>
    %37 = math.exp %36 : vector<2x128xf32>
    %cst_25 = arith.constant 0.000000e+00 : f32
    %38 = vector.broadcast %cst_25 : f32 to vector<2x128xf32>
    %39 = arith.select %29, %26, %38 : vector<2x128xi1>, vector<2x128xf32>
    %c0_26 = arith.constant 0 : index
    %c0_27 = arith.constant 0 : index
    %40 = vector.load %arg2[%c0_26, %c0_27] : memref<2x128xf32, #tpu.memory_space<vmem>>, vector<2x128xf32>
    %41 = arith.mulf %37, %40 : vector<2x128xf32>
    %42 = arith.addf %39, %41 : vector<2x128xf32>
    %c0_28 = arith.constant 0 : index
    %c0_29 = arith.constant 0 : index
    %43 = vector.load %arg11[%c0_28, %c0_29] : memref<2x128xf32, #tpu.memory_space<vmem>>, vector<2x128xf32>
    tpu.vector_store %arg11[%c0_28, %c0_29], %42 {strides = array<i32>} : memref<2x128xf32, #tpu.memory_space<vmem>>, vector<2x128xf32>,
    %44 = tpu.iota {dimensions = array<i32: 0>} : vector<2x128xi32>
    %c2_i32 = arith.constant 2 : i32
    %45 = arith.muli %arg0, %c2_i32 : i32
    %46 = vector.broadcast %45 : i32 to vector<2x128xi32>
    %47 = arith.addi %44, %46 : vector<2x128xi32>
    %c2_i32_30 = arith.constant 2 : i32
    %48 = vector.broadcast %c2_i32_30 : i32 to vector<2x128xi32>
    %49 = arith.cmpi slt, %47, %48 : vector<2x128xi32>
    %50 = arith.andi %29, %49 : vector<2x128xi1>
    %51 = arith.mulf %26, %26 : vector<2x128xf32>
    %cst_31 = arith.constant 0.000000e+00 : f32
    %52 = vector.broadcast %cst_31 : f32 to vector<2x128xf32>
    %53 = arith.select %50, %51, %52 : vector<2x128xi1>, vector<2x128xf32>
    %54 = arith.andi %34, %49 : vector<2x128xi1>
    %55 = arith.mulf %37, %37 : vector<2x128xf32>
    %56 = arith.subf %55, %26 : vector<2x128xf32>
    %cst_32 = arith.constant 5.000000e-01 : f32
    %57 = vector.broadcast %cst_32 : f32 to vector<2x128xf32>
    %58 = arith.subf %56, %57 : vector<2x128xf32>
    %cst_33 = arith.constant 0.000000e+00 : f32
    %59 = vector.broadcast %cst_33 : f32 to vector<2x128xf32>
    %60 = arith.select %54, %58, %59 : vector<2x128xi1>, vector<2x128xf32>
    %61 = arith.addf %53, %60 : vector<2x128xf32>
    %cst_34 = arith.constant 0.000000e+00 : f32
    %62 = vector.broadcast %cst_34 : f32 to vector<1x8x128xf32>
    %63 = vector.shape_cast %61 : vector<2x128xf32> to vector<1x2x128xf32>
    %cst_35 = arith.constant dense<0.000000e+00> : vector<1xf32>
    %64 = vector.multi_reduction <add>, %63, %cst_35 [1, 2] : vector<1x2x128xf32> to vector<1xf32>
    %65 = vector.shape_cast %64 : vector<1xf32> to vector<1x1x1xf32>
    %66 = vector.extract %65[0, 0, 0] : f32 from vector<1x1x1xf32>
    %67 = vector.broadcast %66 : f32 to vector<1x8x128xf32>
    %68 = arith.addf %62, %67 : vector<1x8x128xf32>
    %c0_36 = arith.constant 0 : index
    %c0_37 = arith.constant 0 : index
    %c0_38 = arith.constant 0 : index
    %69 = vector.load %arg12[%c0_36, %c0_37, %c0_38] : memref<1x8x128xf32, #tpu.memory_space<vmem>>, vector<1x8x128xf32>
    tpu.vector_store %arg12[%c0_36, %c0_37, %c0_38], %68 {strides = array<i32>} : memref<1x8x128xf32, #tpu.memory_space<vmem>>, vector<1x8x128xf32>,
    return
  }
  func.func @transform_0(%arg0: i32) -> (i32, i32) {
    %c0_i32 = arith.constant 0 : i32
    %c0_i32_0 = arith.constant 0 : i32
    return %arg0, %c0_i32 : i32, i32
  }
  func.func @transform_1(%arg0: i32) -> (i32, i32) {
    %c0_i32 = arith.constant 0 : i32
    %c0_i32_0 = arith.constant 0 : i32
    return %arg0, %c0_i32 : i32, i32
  }
  func.func @transform_2(%arg0: i32) -> (i32, i32) {
    %c0_i32 = arith.constant 0 : i32
    %c0_i32_0 = arith.constant 0 : i32
    %c0_i32_1 = arith.constant 0 : i32
    return %c0_i32, %c0_i32_0 : i32, i32
  }
  func.func @transform_3(%arg0: i32) -> (i32, i32) {
    %c0_i32 = arith.constant 0 : i32
    %c0_i32_0 = arith.constant 0 : i32
    %c0_i32_1 = arith.constant 0 : i32
    return %c0_i32, %c0_i32_0 : i32, i32
  }
  func.func @transform_4(%arg0: i32) -> (i32, i32) {
    %c0_i32 = arith.constant 0 : i32
    %c0_i32_0 = arith.constant 0 : i32
    %c0_i32_1 = arith.constant 0 : i32
    return %c0_i32, %c0_i32_0 : i32, i32
  }
  func.func @transform_5(%arg0: i32) -> (i32, i32) {
    %c0_i32 = arith.constant 0 : i32
    %c0_i32_0 = arith.constant 0 : i32
    %c0_i32_1 = arith.constant 0 : i32
    return %c0_i32, %c0_i32_0 : i32, i32
  }
  func.func @transform_6(%arg0: i32) -> (i32, i32) {
    %c0_i32 = arith.constant 0 : i32
    %c0_i32_0 = arith.constant 0 : i32
    %c0_i32_1 = arith.constant 0 : i32
    return %c0_i32, %c0_i32_0 : i32, i32
  }
  func.func @transform_7(%arg0: i32) -> (i32, i32) {
    %c0_i32 = arith.constant 0 : i32
    %c0_i32_0 = arith.constant 0 : i32
    %c0_i32_1 = arith.constant 0 : i32
    return %c0_i32, %c0_i32_0 : i32, i32
  }
  func.func @transform_8(%arg0: i32) -> (i32, i32) {
    %c0_i32 = arith.constant 0 : i32
    %c0_i32_0 = arith.constant 0 : i32
    %c0_i32_1 = arith.constant 0 : i32
    return %c0_i32, %c0_i32_0 : i32, i32
  }
  func.func @transform_9(%arg0: i32) -> (i32, i32) {
    %c0_i32 = arith.constant 0 : i32
    %c0_i32_0 = arith.constant 0 : i32
    %c0_i32_1 = arith.constant 0 : i32
    return %c0_i32, %c0_i32_0 : i32, i32
  }
  func.func @transform_10(%arg0: i32) -> (i32, i32) {
    %c0_i32 = arith.constant 0 : i32
    %c0_i32_0 = arith.constant 0 : i32
    return %arg0, %c0_i32 : i32, i32
  }
  func.func @transform_11(%arg0: i32) -> (i32, i32, i32) {
    %c0_i32 = arith.constant 0 : i32
    %c0_i32_0 = arith.constant 0 : i32
    %c0_i32_1 = arith.constant 0 : i32
    return %arg0, %c0_i32, %c0_i32_0 : i32, i32, i32
  }
}

</mosaic_0001>

<llo_original>
// kernel: tpu_custom_call.1
$region0: #{tpu_custom_call.1}
  #allocation0 [shape = 'u32[]', space=smem, size = 0x4, offset = 0x4, fixed_abs, tag = 'smem constant byte address 0x4 - core index']
  #allocation1 [shape = 'u32[144,128]{1,0:T(1,128)}', space=vmem, size = 0x12000, scoped, tag = 'internal scratch']
  %s0 = inlined_call_operand.hbm [shape: f32[2,1024], index: 0, kind: input, shape index: {}]
  %s1 = inlined_call_operand.vmem [shape: f32[2,128], index: 1, kind: input, shape index: {}]
  %s2 = inlined_call_operand.hbm [shape: f32[1024,128], index: 2, kind: input, shape index: {}]
  %s3 = inlined_call_operand.vmem [shape: f32[1,128], index: 3, kind: input, shape index: {}]
  %s4 = inlined_call_operand.hbm [shape: f32[128,128], index: 4, kind: input, shape index: {}]
  %s5 = inlined_call_operand.vmem [shape: f32[1,128], index: 5, kind: input, shape index: {}]
  %s6 = inlined_call_operand.hbm [shape: f32[128,128], index: 6, kind: input, shape index: {}]
  %s7 = inlined_call_operand.vmem [shape: f32[1,128], index: 7, kind: input, shape index: {}]
  %s8 = inlined_call_operand.hbm [shape: f32[128,128], index: 8, kind: input, shape index: {}]
  %s9 = inlined_call_operand.vmem [shape: f32[1,128], index: 9, kind: input, shape index: {}]
  %s10 = inlined_call_operand.hbm [shape: f32[2,128], index: 10, kind: output, shape index: {0}]
  %s11 = inlined_call_operand.hbm [shape: f32[1,8,128], index: 11, kind: output, shape index: {1}]
  %12 = xla_tuple %s10, %s11
  %s13 = sld [smem:[#allocation0]]
  $region78: #{tpu_custom_call.1} parent=0
    _
  %s15 = ssub.s32 1, %s13
  %s16 = scalar_select 0, %s15, %s13
  $region1: #{tpu_custom_call.1} parent=0
    #allocation2 [shape = 'u8[8192]{0}', space=vmem, size = 0x2000, scoped, tag = 'input window, operand 0, single buffered']
    #allocation3 [shape = 's32[1]{0}', space=sflag, size = 0x4, scoped, tag = 'scoped memory for tpu_custom_call.1']
    #allocation4 [shape = 's32[1]{0}', space=sflag, size = 0x4, scoped, tag = 'scoped memory for tpu_custom_call.1']
    #allocation5 [shape = 'u8[524288]{0}', space=vmem, size = 0x80000, scoped, tag = 'input window, operand 2, single buffered']
    #allocation6 [shape = 's32[1]{0}', space=sflag, size = 0x4, scoped, tag = 'scoped memory for tpu_custom_call.1']
    #allocation7 [shape = 'u8[65536]{0}', space=vmem, size = 0x10000, scoped, tag = 'input window, operand 4, single buffered']
    #allocation8 [shape = 'u8[65536]{0}', space=vmem, size = 0x10000, scoped, tag = 'input window, operand 6, single buffered']
    #allocation9 [shape = 's32[1]{0}', space=sflag, size = 0x4, scoped, tag = 'scoped memory for tpu_custom_call.1']
    #allocation10 [shape = 'u8[65536]{0}', space=vmem, size = 0x10000, scoped, tag = 'input window, operand 8, single buffered']
    #allocation11 [shape = 'u8[1024]{0}', space=vmem, size = 0x400, scoped, tag = 'output window, operand 0, single buffered']
    #allocation12 [shape = 'u8[4096]{0}', space=vmem, size = 0x1000, scoped, tag = 'output window, operand 1, single buffered']
    #allocation13 [shape = 's32[1]{0}', space=sflag, size = 0x4, scoped, tag = 'scoped memory for tpu_custom_call.1']
    %17 = vsyncpa [#allocation3], 0
    %18 = vsyncpa [#allocation6], 0
    %19 = vsyncpa [#allocation9], 0
    %20 = vsyncpa [#allocation4], 0
    %21 = vsyncpa [#allocation13], 0
    // Predicated region
    $region2: #{tpu_custom_call.1} parent=1 // pred_check
      _
    $region3: #{tpu_custom_call.1} parent=1 // pred_check_branch
      %23 = sbr.rel (0) target = $region5
    $region4: #{tpu_custom_call.1} parent=1 // pred_region
      %s25 = ssub.s32 256, 256
      %26 = vsyncadd [#allocation3], %s25
      %s28 = sshll.u32 [#allocation2], 4
      %s29 = int_to_ptr.vmem [resolvable:$true] %s28
      %31 = dma.hbm_to_vmem [thread:$0]  %s0, 256, %s29, [#allocation3]
    $region5: #{tpu_custom_call.1} parent=1 // pred_fallthru
      _
    // Predicated region
    $region6: #{tpu_custom_call.1} parent=1 // pred_check
      _
    $region7: #{tpu_custom_call.1} parent=1 // pred_check_branch
      %33 = sbr.rel (0) target = $region9
    $region8: #{tpu_custom_call.1} parent=1 // pred_region
      _
    $region9: #{tpu_custom_call.1} parent=1 // pred_fallthru
      _
    // Predicated region
    $region10: #{tpu_custom_call.1} parent=1 // pred_check
      _
    $region11: #{tpu_custom_call.1} parent=1 // pred_check_branch
      %35 = sbr.rel (0) target = $region13
    $region12: #{tpu_custom_call.1} parent=1 // pred_region
      %s37 = ssub.s32 16384, 16384
      %38 = vsyncadd [#allocation6], %s37
      %s39 = sshll.u32 [#allocation5], 4
      %s40 = int_to_ptr.vmem [resolvable:$true] %s39
      %45 = dma.hbm_to_vmem [thread:$0]  %s2, 16384, %s40, [#allocation6], 128, 128, 8
    $region13: #{tpu_custom_call.1} parent=1 // pred_fallthru
      _
    // Predicated region
    $region14: #{tpu_custom_call.1} parent=1 // pred_check
      _
    $region15: #{tpu_custom_call.1} parent=1 // pred_check_branch
      %47 = sbr.rel (0) target = $region17
    $region16: #{tpu_custom_call.1} parent=1 // pred_region
      _
    $region17: #{tpu_custom_call.1} parent=1 // pred_fallthru
      _
    // Predicated region
    $region18: #{tpu_custom_call.1} parent=1 // pred_check
      _
    $region19: #{tpu_custom_call.1} parent=1 // pred_check_branch
      %49 = sbr.rel (0) target = $region21
    $region20: #{tpu_custom_call.1} parent=1 // pred_region
      %s51 = ssub.s32 2048, 2048
      %52 = vsyncadd [#allocation6], %s51
      %s53 = sshll.u32 [#allocation7], 4
      %s54 = int_to_ptr.vmem [resolvable:$true] %s53
      %59 = dma.hbm_to_vmem [thread:$0]  %s4, 2048, %s54, [#allocation6], 128, 128, 8
    $region21: #{tpu_custom_call.1} parent=1 // pred_fallthru
      _
    // Predicated region
    $region22: #{tpu_custom_call.1} parent=1 // pred_check
      _
    $region23: #{tpu_custom_call.1} parent=1 // pred_check_branch
      %61 = sbr.rel (0) target = $region25
    $region24: #{tpu_custom_call.1} parent=1 // pred_region
      _
    $region25: #{tpu_custom_call.1} parent=1 // pred_fallthru
      _
    // Predicated region
    $region26: #{tpu_custom_call.1} parent=1 // pred_check
      _
    $region27: #{tpu_custom_call.1} parent=1 // pred_check_branch
      %63 = sbr.rel (0) target = $region29
    $region28: #{tpu_custom_call.1} parent=1 // pred_region
      %s65 = ssub.s32 2048, 2048
      %66 = vsyncadd [#allocation9], %s65
      %s67 = sshll.u32 [#allocation8], 4
      %s68 = int_to_ptr.vmem [resolvable:$true] %s67
      %73 = dma.hbm_to_vmem [thread:$0]  %s6, 2048, %s68, [#allocation9], 128, 128, 8
    $region29: #{tpu_custom_call.1} parent=1 // pred_fallthru
      _
    // Predicated region
    $region30: #{tpu_custom_call.1} parent=1 // pred_check
      _
    $region31: #{tpu_custom_call.1} parent=1 // pred_check_branch
      %75 = sbr.rel (0) target = $region33
    $region32: #{tpu_custom_call.1} parent=1 // pred_region
      _
    $region33: #{tpu_custom_call.1} parent=1 // pred_fallthru
      _
    // Predicated region
    $region34: #{tpu_custom_call.1} parent=1 // pred_check
      _
    $region35: #{tpu_custom_call.1} parent=1 // pred_check_branch
      %77 = sbr.rel (0) target = $region37
    $region36: #{tpu_custom_call.1} parent=1 // pred_region
      %s79 = ssub.s32 2048, 2048
      %80 = vsyncadd [#allocation9], %s79
      %s81 = sshll.u32 [#allocation10], 4
      %s82 = int_to_ptr.vmem [resolvable:$true] %s81
      %87 = dma.hbm_to_vmem [thread:$0]  %s8, 2048, %s82, [#allocation9], 128, 128, 8
    $region37: #{tpu_custom_call.1} parent=1 // pred_fallthru
      _
    // Predicated region
    $region38: #{tpu_custom_call.1} parent=1 // pred_check
      _
    $region39: #{tpu_custom_call.1} parent=1 // pred_check_branch
      %89 = sbr.rel (0) target = $region41
    $region40: #{tpu_custom_call.1} parent=1 // pred_region
      _
    $region41: #{tpu_custom_call.1} parent=1 // pred_fallthru
      _
    // Predicated region
    $region42: #{tpu_custom_call.1} parent=1 // pred_check
      _
    $region43: #{tpu_custom_call.1} parent=1 // pred_check_branch
      %91 = sbr.rel (0) target = $region45
    $region44: #{tpu_custom_call.1} parent=1 // pred_region
      %92 = dma.done [#allocation3], 256
    $region45: #{tpu_custom_call.1} parent=1 // pred_fallthru
      _
    // Predicated region
    $region46: #{tpu_custom_call.1} parent=1 // pred_check
      _
    $region47: #{tpu_custom_call.1} parent=1 // pred_check_branch
      %94 = sbr.rel (0) target = $region49
    $region48: #{tpu_custom_call.1} parent=1 // pred_region
      %95 = dma.done [#allocation6], 16384
    $region49: #{tpu_custom_call.1} parent=1 // pred_fallthru
      _
    // Predicated region
    $region50: #{tpu_custom_call.1} parent=1 // pred_check
      _
    $region51: #{tpu_custom_call.1} parent=1 // pred_check_branch
      %97 = sbr.rel (0) target = $region53
    $region52: #{tpu_custom_call.1} parent=1 // pred_region
      %98 = dma.done [#allocation6], 2048
    $region53: #{tpu_custom_call.1} parent=1 // pred_fallthru
      _
    // Predicated region
    $region54: #{tpu_custom_call.1} parent=1 // pred_check
      _
    $region55: #{tpu_custom_call.1} parent=1 // pred_check_branch
      %100 = sbr.rel (0) target = $region57
    $region56: #{tpu_custom_call.1} parent=1 // pred_region
      %101 = dma.done [#allocation9], 2048
    $region57: #{tpu_custom_call.1} parent=1 // pred_fallthru
      _
    // Predicated region
    $region58: #{tpu_custom_call.1} parent=1 // pred_check
      _
    $region59: #{tpu_custom_call.1} parent=1 // pred_check_branch
      %103 = sbr.rel (0) target = $region61
    $region60: #{tpu_custom_call.1} parent=1 // pred_region
      %104 = dma.done [#allocation9], 2048
    $region61: #{tpu_custom_call.1} parent=1 // pred_fallthru
      _
    %v105 = vld [vmem:[#allocation2] sm:$0xff]
    %v106 = vld [vmem:[#allocation2 + $0x8] sm:$0xff]
    %v107 = vld [vmem:[#allocation5] sm:$0xff]
    %v108 = vld [vmem:[#allocation5 + $0x8] sm:$0xff]
    %v109 = vld [vmem:[#allocation5 + $0x10] sm:$0xff]
    %v110 = vld [vmem:[#allocation5 + $0x18] sm:$0xff]
    %v111 = vld [vmem:[#allocation5 + $0x20] sm:$0xff]
    %v112 = vld [vmem:[#allocation5 + $0x28] sm:$0xff]
    %v113 = vld [vmem:[#allocation5 + $0x30] sm:$0xff]
    %v114 = vld [vmem:[#allocation5 + $0x38] sm:$0xff]
    %v115 = vld [vmem:[#allocation5 + $0x40] sm:$0xff]
    %v116 = vld [vmem:[#allocation5 + $0x48] sm:$0xff]
    %v117 = vld [vmem:[#allocation5 + $0x50] sm:$0xff]
    %v118 = vld [vmem:[#allocation5 + $0x58] sm:$0xff]
    %v119 = vld [vmem:[#allocation5 + $0x60] sm:$0xff]
    %v120 = vld [vmem:[#allocation5 + $0x68] sm:$0xff]
    %v121 = vld [vmem:[#allocation5 + $0x70] sm:$0xff]
    %v122 = vld [vmem:[#allocation5 + $0x78] sm:$0xff]
    %v123 = vld [vmem:[#allocation5 + $0x80] sm:$0xff]
    %v124 = vld [vmem:[#allocation5 + $0x88] sm:$0xff]
    %v125 = vld [vmem:[#allocation5 + $0x90] sm:$0xff]
    %v126 = vld [vmem:[#allocation5 + $0x98] sm:$0xff]
    %v127 = vld [vmem:[#allocation5 + $0xa0] sm:$0xff]
    %v128 = vld [vmem:[#allocation5 + $0xa8] sm:$0xff]
    %v129 = vld [vmem:[#allocation5 + $0xb0] sm:$0xff]
    %v130 = vld [vmem:[#allocation5 + $0xb8] sm:$0xff]
    %v131 = vld [vmem:[#allocation5 + $0xc0] sm:$0xff]
    %v132 = vld [vmem:[#allocation5 + $0xc8] sm:$0xff]
    %v133 = vld [vmem:[#allocation5 + $0xd0] sm:$0xff]
    %v134 = vld [vmem:[#allocation5 + $0xd8] sm:$0xff]
    %v135 = vld [vmem:[#allocation5 + $0xe0] sm:$0xff]
    %v136 = vld [vmem:[#allocation5 + $0xe8] sm:$0xff]
    %v137 = vld [vmem:[#allocation5 + $0xf0] sm:$0xff]
    %v138 = vld [vmem:[#allocation5 + $0xf8] sm:$0xff]
    %v139 = vld [vmem:[#allocation5 + $0x100] sm:$0xff]
    %v140 = vld [vmem:[#allocation5 + $0x108] sm:$0xff]
    %v141 = vld [vmem:[#allocation5 + $0x110] sm:$0xff]
    %v142 = vld [vmem:[#allocation5 + $0x118] sm:$0xff]
    %v143 = vld [vmem:[#allocation5 + $0x120] sm:$0xff]
    %v144 = vld [vmem:[#allocation5 + $0x128] sm:$0xff]
    %v145 = vld [vmem:[#allocation5 + $0x130] sm:$0xff]
    %v146 = vld [vmem:[#allocation5 + $0x138] sm:$0xff]
    %v147 = vld [vmem:[#allocation5 + $0x140] sm:$0xff]
    %v148 = vld [vmem:[#allocation5 + $0x148] sm:$0xff]
    %v149 = vld [vmem:[#allocation5 + $0x150] sm:$0xff]
    %v150 = vld [vmem:[#allocation5 + $0x158] sm:$0xff]
    %v151 = vld [vmem:[#allocation5 + $0x160] sm:$0xff]
    %v152 = vld [vmem:[#allocation5 + $0x168] sm:$0xff]
    %v153 = vld [vmem:[#allocation5 + $0x170] sm:$0xff]
    %v154 = vld [vmem:[#allocation5 + $0x178] sm:$0xff]
    %v155 = vld [vmem:[#allocation5 + $0x180] sm:$0xff]
    %v156 = vld [vmem:[#allocation5 + $0x188] sm:$0xff]
    %v157 = vld [vmem:[#allocation5 + $0x190] sm:$0xff]
    %v158 = vld [vmem:[#allocation5 + $0x198] sm:$0xff]
    %v159 = vld [vmem:[#allocation5 + $0x1a0] sm:$0xff]
    %v160 = vld [vmem:[#allocation5 + $0x1a8] sm:$0xff]
    %v161 = vld [vmem:[#allocation5 + $0x1b0] sm:$0xff]
    %v162 = vld [vmem:[#allocation5 + $0x1b8] sm:$0xff]
    %v163 = vld [vmem:[#allocation5 + $0x1c0] sm:$0xff]
    %v164 = vld [vmem:[#allocation5 + $0x1c8] sm:$0xff]
    %v165 = vld [vmem:[#allocation5 + $0x1d0] sm:$0xff]
    %v166 = vld [vmem:[#allocation5 + $0x1d8] sm:$0xff]
    %v167 = vld [vmem:[#allocation5 + $0x1e0] sm:$0xff]
    %v168 = vld [vmem:[#allocation5 + $0x1e8] sm:$0xff]
    %v169 = vld [vmem:[#allocation5 + $0x1f0] sm:$0xff]
    %v170 = vld [vmem:[#allocation5 + $0x1f8] sm:$0xff]
    %v171 = vld [vmem:[#allocation5 + $0x200] sm:$0xff]
    %v172 = vld [vmem:[#allocation5 + $0x208] sm:$0xff]
    %v173 = vld [vmem:[#allocation5 + $0x210] sm:$0xff]
    %v174 = vld [vmem:[#allocation5 + $0x218] sm:$0xff]
    %v175 = vld [vmem:[#allocation5 + $0x220] sm:$0xff]
    %v176 = vld [vmem:[#allocation5 + $0x228] sm:$0xff]
    %v177 = vld [vmem:[#allocation5 + $0x230] sm:$0xff]
    %v178 = vld [vmem:[#allocation5 + $0x238] sm:$0xff]
    %v179 = vld [vmem:[#allocation5 + $0x240] sm:$0xff]
    %v180 = vld [vmem:[#allocation5 + $0x248] sm:$0xff]
    %v181 = vld [vmem:[#allocation5 + $0x250] sm:$0xff]
    %v182 = vld [vmem:[#allocation5 + $0x258] sm:$0xff]
    %v183 = vld [vmem:[#allocation5 + $0x260] sm:$0xff]
    %v184 = vld [vmem:[#allocation5 + $0x268] sm:$0xff]
    %v185 = vld [vmem:[#allocation5 + $0x270] sm:$0xff]
    %v186 = vld [vmem:[#allocation5 + $0x278] sm:$0xff]
    %v187 = vld [vmem:[#allocation5 + $0x280] sm:$0xff]
    %v188 = vld [vmem:[#allocation5 + $0x288] sm:$0xff]
    %v189 = vld [vmem:[#allocation5 + $0x290] sm:$0xff]
    %v190 = vld [vmem:[#allocation5 + $0x298] sm:$0xff]
    %v191 = vld [vmem:[#allocation5 + $0x2a0] sm:$0xff]
    %v192 = vld [vmem:[#allocation5 + $0x2a8] sm:$0xff]
    %v193 = vld [vmem:[#allocation5 + $0x2b0] sm:$0xff]
    %v194 = vld [vmem:[#allocation5 + $0x2b8] sm:$0xff]
    %v195 = vld [vmem:[#allocation5 + $0x2c0] sm:$0xff]
    %v196 = vld [vmem:[#allocation5 + $0x2c8] sm:$0xff]
    %v197 = vld [vmem:[#allocation5 + $0x2d0] sm:$0xff]
    %v198 = vld [vmem:[#allocation5 + $0x2d8] sm:$0xff]
    %v199 = vld [vmem:[#allocation5 + $0x2e0] sm:$0xff]
    %v200 = vld [vmem:[#allocation5 + $0x2e8] sm:$0xff]
    %v201 = vld [vmem:[#allocation5 + $0x2f0] sm:$0xff]
    %v202 = vld [vmem:[#allocation5 + $0x2f8] sm:$0xff]
    %v203 = vld [vmem:[#allocation5 + $0x300] sm:$0xff]
    %v204 = vld [vmem:[#allocation5 + $0x308] sm:$0xff]
    %v205 = vld [vmem:[#allocation5 + $0x310] sm:$0xff]
    %v206 = vld [vmem:[#allocation5 + $0x318] sm:$0xff]
    %v207 = vld [vmem:[#allocation5 + $0x320] sm:$0xff]
    %v208 = vld [vmem:[#allocation5 + $0x328] sm:$0xff]
    %v209 = vld [vmem:[#allocation5 + $0x330] sm:$0xff]
    %v210 = vld [vmem:[#allocation5 + $0x338] sm:$0xff]
    %v211 = vld [vmem:[#allocation5 + $0x340] sm:$0xff]
    %v212 = vld [vmem:[#allocation5 + $0x348] sm:$0xff]
    %v213 = vld [vmem:[#allocation5 + $0x350] sm:$0xff]
    %v214 = vld [vmem:[#allocation5 + $0x358] sm:$0xff]
    %v215 = vld [vmem:[#allocation5 + $0x360] sm:$0xff]
    %v216 = vld [vmem:[#allocation5 + $0x368] sm:$0xff]
    %v217 = vld [vmem:[#allocation5 + $0x370] sm:$0xff]
    %v218 = vld [vmem:[#allocation5 + $0x378] sm:$0xff]
    %v219 = vld [vmem:[#allocation5 + $0x380] sm:$0xff]
    %v220 = vld [vmem:[#allocation5 + $0x388] sm:$0xff]
    %v221 = vld [vmem:[#allocation5 + $0x390] sm:$0xff]
    %v222 = vld [vmem:[#allocation5 + $0x398] sm:$0xff]
    %v223 = vld [vmem:[#allocation5 + $0x3a0] sm:$0xff]
    %v224 = vld [vmem:[#allocation5 + $0x3a8] sm:$0xff]
    %v225 = vld [vmem:[#allocation5 + $0x3b0] sm:$0xff]
    %v226 = vld [vmem:[#allocation5 + $0x3b8] sm:$0xff]
    %v227 = vld [vmem:[#allocation5 + $0x3c0] sm:$0xff]
    %v228 = vld [vmem:[#allocation5 + $0x3c8] sm:$0xff]
    %v229 = vld [vmem:[#allocation5 + $0x3d0] sm:$0xff]
    %v230 = vld [vmem:[#allocation5 + $0x3d8] sm:$0xff]
    %v231 = vld [vmem:[#allocation5 + $0x3e0] sm:$0xff]
    %v232 = vld [vmem:[#allocation5 + $0x3e8] sm:$0xff]
    %v233 = vld [vmem:[#allocation5 + $0x3f0] sm:$0xff]
    %v234 = vld [vmem:[#allocation5 + $0x3f8] sm:$0xff]
    %v235 = vld [vmem:[%s3] sm:$0x1]
    %v237 = vlaneseq
    %v238 = vshrl.u32 %v237, 7
    %v239 = vsub.s32 0, %v238
    %v240 = vrot.slane %v235, %v239
    %v244 = vcombine.high %v105, %v105
    %v246 = vunpack.c.l.s4 1983009808
    %v247 = vunpack.c.0.s8 %v246
    %v248 = vlaneseq
    %v249 = vshrl.u32 %v248, 7
    %v250 = vsub.s32 %v247, %v249
    %v251 = vrot.slane %v105, %v250
    %v253 = vunpack.c.l.s4 1983009808
    %v254 = vunpack.c.0.s8 %v253
    %v255 = vlaneseq
    %v256 = vshrl.u32 %v255, 7
    %v257 = vsub.s32 %v254, %v256
    %v258 = vrot.slane %v244, %v257
    %v259 = vcombine.high %v251, %v251
    %v260 = vcombine.high %v258, %v258
    %v261 = vcombine.high %v106, %v106
    %v263 = vunpack.c.l.s4 1983009808
    %v264 = vunpack.c.0.s8 %v263
    %v265 = vlaneseq
    %v266 = vshrl.u32 %v265, 7
    %v267 = vsub.s32 %v264, %v266
    %v268 = vrot.slane %v106, %v267
    %v270 = vunpack.c.l.s4 1983009808
    %v271 = vunpack.c.0.s8 %v270
    %v272 = vlaneseq
    %v273 = vshrl.u32 %v272, 7
    %v274 = vsub.s32 %v271, %v273
    %v275 = vrot.slane %v261, %v274
    %v276 = vcombine.high %v268, %v268
    %v277 = vcombine.high %v275, %v275
    %286 = vmatprep.subr.mxu0 0.0
    %287 = vmatpush1.msra.mxu0 %v107
    %288 = vmatprep.subr.mxu0 0.0
    %289 = vmatpush1.msra.mxu0 %v108
    %290 = vmatprep.subr.mxu0 0.0
    %291 = vmatpush1.msra.mxu0 %v109
    %292 = vmatprep.subr.mxu0 0.0
    %293 = vmatpush1.msra.mxu0 %v110
    %294 = vmatprep.subr.mxu0 0.0
    %295 = vmatpush1.msra.mxu0 %v111
    %296 = vmatprep.subr.mxu0 0.0
    %297 = vmatpush1.msra.mxu0 %v112
    %298 = vmatprep.subr.mxu0 0.0
    %299 = vmatpush1.msra.mxu0 %v113
    %300 = vmatprep.subr.mxu0 0.0
    %301 = vmatpush1.msra.mxu0 %v114
    %302 = vmatprep.subr.mxu0 0.0
    %303 = vmatpush1.msra.mxu0 %v115
    %304 = vmatprep.subr.mxu0 0.0
    %305 = vmatpush1.msra.mxu0 %v116
    %306 = vmatprep.subr.mxu0 0.0
    %307 = vmatpush1.msra.mxu0 %v117
    %308 = vmatprep.subr.mxu0 0.0
    %309 = vmatpush1.msra.mxu0 %v118
    %310 = vmatprep.subr.mxu0 0.0
    %311 = vmatpush1.msra.mxu0 %v119
    %312 = vmatprep.subr.mxu0 0.0
    %313 = vmatpush1.msra.mxu0 %v120
    %314 = vmatprep.subr.mxu0 0.0
    %315 = vmatpush1.msra.mxu0 %v121
    %316 = vmatprep.subr.mxu0 0.0
    %317 = vmatpush1.msra.mxu0 %v122
    %318 = vmatprep.subr.mxu0 0.0
    %319 = vmatpush1.msra.mxu0 %v123
    %320 = vmatprep.subr.mxu0 0.0
    %321 = vmatpush1.msra.mxu0 %v124
    %322 = vmatprep.subr.mxu0 0.0
    %323 = vmatpush1.msra.mxu0 %v125
    %324 = vmatprep.subr.mxu0 0.0
    %325 = vmatpush1.msra.mxu0 %v126
    %326 = vmatprep.subr.mxu0 0.0
    %327 = vmatpush1.msra.mxu0 %v127
    %328 = vmatprep.subr.mxu0 0.0
    %329 = vmatpush1.msra.mxu0 %v128
    %330 = vmatprep.subr.mxu0 0.0
    %331 = vmatpush1.msra.mxu0 %v129
    %332 = vmatprep.subr.mxu0 0.0
    %333 = vmatpush1.msra.mxu0 %v130
    %334 = vmatprep.subr.mxu0 0.0
    %335 = vmatpush1.msra.mxu0 %v131
    %336 = vmatprep.subr.mxu0 0.0
    %337 = vmatpush1.msra.mxu0 %v132
    %338 = vmatprep.subr.mxu0 0.0
    %339 = vmatpush1.msra.mxu0 %v133
    %340 = vmatprep.subr.mxu0 0.0
    %341 = vmatpush1.msra.mxu0 %v134
    %342 = vmatprep.subr.mxu0 0.0
    %343 = vmatpush1.msra.mxu0 %v135
    %344 = vmatprep.subr.mxu0 0.0
    %345 = vmatpush1.msra.mxu0 %v136
    %346 = vmatprep.subr.mxu0 0.0
    %347 = vmatpush1.msra.mxu0 %v137
    %348 = vmatprep.subr.mxu0 0.0
    %349 = vmatpush1.msra.mxu0 %v138
    %350 = vmatprep.mubr.f32.mxu0 %v259
    %351 = vmatmul.mubr.f32.gmra.mrb[0].mxu0 %v251
    %v352 = vpop.f32.mrb[0].mxu0
    %v353 = vadd.f32 %v240, %v352
    %v354 = vpop.f32.mrb[0].mxu0
    %355 = vdwg.mxu0
    %356 = vmatprep.subr.mxu0 0.0
    %357 = vmatpush1.msra.mxu0 %v139
    %358 = vmatprep.subr.mxu0 0.0
    %359 = vmatpush1.msra.mxu0 %v140
    %360 = vmatprep.subr.mxu0 0.0
    %361 = vmatpush1.msra.mxu0 %v141
    %362 = vmatprep.subr.mxu0 0.0
    %363 = vmatpush1.msra.mxu0 %v142
    %364 = vmatprep.subr.mxu0 0.0
    %365 = vmatpush1.msra.mxu0 %v143
    %366 = vmatprep.subr.mxu0 0.0
    %367 = vmatpush1.msra.mxu0 %v144
    %368 = vmatprep.subr.mxu0 0.0
    %369 = vmatpush1.msra.mxu0 %v145
    %370 = vmatprep.subr.mxu0 0.0
    %371 = vmatpush1.msra.mxu0 %v146
    %372 = vmatprep.subr.mxu0 0.0
    %373 = vmatpush1.msra.mxu0 %v147
    %374 = vmatprep.subr.mxu0 0.0
    %375 = vmatpush1.msra.mxu0 %v148
    %376 = vmatprep.subr.mxu0 0.0
    %377 = vmatpush1.msra.mxu0 %v149
    %378 = vmatprep.subr.mxu0 0.0
    %379 = vmatpush1.msra.mxu0 %v150
    %380 = vmatprep.subr.mxu0 0.0
    %381 = vmatpush1.msra.mxu0 %v151
    %382 = vmatprep.subr.mxu0 0.0
    %383 = vmatpush1.msra.mxu0 %v152
    %384 = vmatprep.subr.mxu0 0.0
    %385 = vmatpush1.msra.mxu0 %v153
    %386 = vmatprep.subr.mxu0 0.0
    %387 = vmatpush1.msra.mxu0 %v154
    %388 = vmatprep.subr.mxu0 0.0
    %389 = vmatpush1.msra.mxu0 %v155
    %390 = vmatprep.subr.mxu0 0.0
    %391 = vmatpush1.msra.mxu0 %v156
    %392 = vmatprep.subr.mxu0 0.0
    %393 = vmatpush1.msra.mxu0 %v157
    %394 = vmatprep.subr.mxu0 0.0
    %395 = vmatpush1.msra.mxu0 %v158
    %396 = vmatprep.subr.mxu0 0.0
    %397 = vmatpush1.msra.mxu0 %v159
    %398 = vmatprep.subr.mxu0 0.0
    %399 = vmatpush1.msra.mxu0 %v160
    %400 = vmatprep.subr.mxu0 0.0
    %401 = vmatpush1.msra.mxu0 %v161
    %402 = vmatprep.subr.mxu0 0.0
    %403 = vmatpush1.msra.mxu0 %v162
    %404 = vmatprep.subr.mxu0 0.0
    %405 = vmatpush1.msra.mxu0 %v163
    %406 = vmatprep.subr.mxu0 0.0
    %407 = vmatpush1.msra.mxu0 %v164
    %408 = vmatprep.subr.mxu0 0.0
    %409 = vmatpush1.msra.mxu0 %v165
    %410 = vmatprep.subr.mxu0 0.0
    %411 = vmatpush1.msra.mxu0 %v166
    %412 = vmatprep.subr.mxu0 0.0
    %413 = vmatpush1.msra.mxu0 %v167
    %414 = vmatprep.subr.mxu0 0.0
    %415 = vmatpush1.msra.mxu0 %v168
    %416 = vmatprep.subr.mxu0 0.0
    %417 = vmatpush1.msra.mxu0 %v169
    %418 = vmatprep.subr.mxu0 0.0
    %419 = vmatpush1.msra.mxu0 %v170
    %420 = vmatprep.mubr.f32.mxu0 %v260
    %421 = vmatmul.mubr.f32.gmra.mrb[0].mxu0 %v258
    %v422 = vpop.f32.mrb[0].mxu0
    %v423 = vadd.f32 %v353, %v422
    %v424 = vpop.f32.mrb[0].mxu0
    %425 = vdwg.mxu0
    %426 = vmatprep.subr.mxu0 0.0
    %427 = vmatpush1.msra.mxu0 %v171
    %428 = vmatprep.subr.mxu0 0.0
    %429 = vmatpush1.msra.mxu0 %v172
    %430 = vmatprep.subr.mxu0 0.0
    %431 = vmatpush1.msra.mxu0 %v173
    %432 = vmatprep.subr.mxu0 0.0
    %433 = vmatpush1.msra.mxu0 %v174
    %434 = vmatprep.subr.mxu0 0.0
    %435 = vmatpush1.msra.mxu0 %v175
    %436 = vmatprep.subr.mxu0 0.0
    %437 = vmatpush1.msra.mxu0 %v176
    %438 = vmatprep.subr.mxu0 0.0
    %439 = vmatpush1.msra.mxu0 %v177
    %440 = vmatprep.subr.mxu0 0.0
    %441 = vmatpush1.msra.mxu0 %v178
    %442 = vmatprep.subr.mxu0 0.0
    %443 = vmatpush1.msra.mxu0 %v179
    %444 = vmatprep.subr.mxu0 0.0
    %445 = vmatpush1.msra.mxu0 %v180
    %446 = vmatprep.subr.mxu0 0.0
    %447 = vmatpush1.msra.mxu0 %v181
    %448 = vmatprep.subr.mxu0 0.0
    %449 = vmatpush1.msra.mxu0 %v182
    %450 = vmatprep.subr.mxu0 0.0
    %451 = vmatpush1.msra.mxu0 %v183
    %452 = vmatprep.subr.mxu0 0.0
    %453 = vmatpush1.msra.mxu0 %v184
    %454 = vmatprep.subr.mxu0 0.0
    %455 = vmatpush1.msra.mxu0 %v185
    %456 = vmatprep.subr.mxu0 0.0
    %457 = vmatpush1.msra.mxu0 %v186
    %458 = vmatprep.subr.mxu0 0.0
    %459 = vmatpush1.msra.mxu0 %v187
    %460 = vmatprep.subr.mxu0 0.0
    %461 = vmatpush1.msra.mxu0 %v188
    %462 = vmatprep.subr.mxu0 0.0
    %463 = vmatpush1.msra.mxu0 %v189
    %464 = vmatprep.subr.mxu0 0.0
    %465 = vmatpush1.msra.mxu0 %v190
    %466 = vmatprep.subr.mxu0 0.0
    %467 = vmatpush1.msra.mxu0 %v191
    %468 = vmatprep.subr.mxu0 0.0
    %469 = vmatpush1.msra.mxu0 %v192
    %470 = vmatprep.subr.mxu0 0.0
    %471 = vmatpush1.msra.mxu0 %v193
    %472 = vmatprep.subr.mxu0 0.0
    %473 = vmatpush1.msra.mxu0 %v194
    %474 = vmatprep.subr.mxu0 0.0
    %475 = vmatpush1.msra.mxu0 %v195
    %476 = vmatprep.subr.mxu0 0.0
    %477 = vmatpush1.msra.mxu0 %v196
    %478 = vmatprep.subr.mxu0 0.0
    %479 = vmatpush1.msra.mxu0 %v197
    %480 = vmatprep.subr.mxu0 0.0
    %481 = vmatpush1.msra.mxu0 %v198
    %482 = vmatprep.subr.mxu0 0.0
    %483 = vmatpush1.msra.mxu0 %v199
    %484 = vmatprep.subr.mxu0 0.0
    %485 = vmatpush1.msra.mxu0 %v200
    %486 = vmatprep.subr.mxu0 0.0
    %487 = vmatpush1.msra.mxu0 %v201
    %488 = vmatprep.subr.mxu0 0.0
    %489 = vmatpush1.msra.mxu0 %v202
    %490 = vmatprep.mubr.f32.mxu0 %v276
    %491 = vmatmul.mubr.f32.gmra.mrb[0].mxu0 %v268
    %v492 = vpop.f32.mrb[0].mxu0
    %v493 = vadd.f32 %v423, %v492
    %v494 = vpop.f32.mrb[0].mxu0
    %495 = vdwg.mxu0
    %496 = vmatprep.subr.mxu0 0.0
    %497 = vmatpush1.msra.mxu0 %v203
    %498 = vmatprep.subr.mxu0 0.0
    %499 = vmatpush1.msra.mxu0 %v204
    %500 = vmatprep.subr.mxu0 0.0
    %501 = vmatpush1.msra.mxu0 %v205
    %502 = vmatprep.subr.mxu0 0.0
    %503 = vmatpush1.msra.mxu0 %v206
    %504 = vmatprep.subr.mxu0 0.0
    %505 = vmatpush1.msra.mxu0 %v207
    %506 = vmatprep.subr.mxu0 0.0
    %507 = vmatpush1.msra.mxu0 %v208
    %508 = vmatprep.subr.mxu0 0.0
    %509 = vmatpush1.msra.mxu0 %v209
    %510 = vmatprep.subr.mxu0 0.0
    %511 = vmatpush1.msra.mxu0 %v210
    %512 = vmatprep.subr.mxu0 0.0
    %513 = vmatpush1.msra.mxu0 %v211
    %514 = vmatprep.subr.mxu0 0.0
    %515 = vmatpush1.msra.mxu0 %v212
    %516 = vmatprep.subr.mxu0 0.0
    %517 = vmatpush1.msra.mxu0 %v213
    %518 = vmatprep.subr.mxu0 0.0
    %519 = vmatpush1.msra.mxu0 %v214
    %520 = vmatprep.subr.mxu0 0.0
    %521 = vmatpush1.msra.mxu0 %v215
    %522 = vmatprep.subr.mxu0 0.0
    %523 = vmatpush1.msra.mxu0 %v216
    %524 = vmatprep.subr.mxu0 0.0
    %525 = vmatpush1.msra.mxu0 %v217
    %526 = vmatprep.subr.mxu0 0.0
    %527 = vmatpush1.msra.mxu0 %v218
    %528 = vmatprep.subr.mxu0 0.0
    %529 = vmatpush1.msra.mxu0 %v219
    %530 = vmatprep.subr.mxu0 0.0
    %531 = vmatpush1.msra.mxu0 %v220
    %532 = vmatprep.subr.mxu0 0.0
    %533 = vmatpush1.msra.mxu0 %v221
    %534 = vmatprep.subr.mxu0 0.0
    %535 = vmatpush1.msra.mxu0 %v222
    %536 = vmatprep.subr.mxu0 0.0
    %537 = vmatpush1.msra.mxu0 %v223
    %538 = vmatprep.subr.mxu0 0.0
    %539 = vmatpush1.msra.mxu0 %v224
    %540 = vmatprep.subr.mxu0 0.0
    %541 = vmatpush1.msra.mxu0 %v225
    %542 = vmatprep.subr.mxu0 0.0
    %543 = vmatpush1.msra.mxu0 %v226
    %544 = vmatprep.subr.mxu0 0.0
    %545 = vmatpush1.msra.mxu0 %v227
    %546 = vmatprep.subr.mxu0 0.0
    %547 = vmatpush1.msra.mxu0 %v228
    %548 = vmatprep.subr.mxu0 0.0
    %549 = vmatpush1.msra.mxu0 %v229
    %550 = vmatprep.subr.mxu0 0.0
    %551 = vmatpush1.msra.mxu0 %v230
    %552 = vmatprep.subr.mxu0 0.0
    %553 = vmatpush1.msra.mxu0 %v231
    %554 = vmatprep.subr.mxu0 0.0
    %555 = vmatpush1.msra.mxu0 %v232
    %556 = vmatprep.subr.mxu0 0.0
    %557 = vmatpush1.msra.mxu0 %v233
    %558 = vmatprep.subr.mxu0 0.0
    %559 = vmatpush1.msra.mxu0 %v234
    %560 = vmatprep.mubr.f32.mxu0 %v277
    %561 = vmatmul.mubr.f32.gmra.mrb[0].mxu0 %v275
    %v562 = vpop.f32.mrb[0].mxu0
    %v563 = vadd.f32 %v493, %v562
    %v564 = vpop.f32.mrb[0].mxu0
    %565 = vdwg.mxu0
    %v566 = vmax.f32 %v563, 0.0
    %v567 = vld [vmem:[#allocation7] sm:$0xff]
    %v568 = vld [vmem:[#allocation7 + $0x8] sm:$0xff]
    %v569 = vld [vmem:[#allocation7 + $0x10] sm:$0xff]
    %v570 = vld [vmem:[#allocation7 + $0x18] sm:$0xff]
    %v571 = vld [vmem:[#allocation7 + $0x20] sm:$0xff]
    %v572 = vld [vmem:[#allocation7 + $0x28] sm:$0xff]
    %v573 = vld [vmem:[#allocation7 + $0x30] sm:$0xff]
    %v574 = vld [vmem:[#allocation7 + $0x38] sm:$0xff]
    %v575 = vld [vmem:[#allocation7 + $0x40] sm:$0xff]
    %v576 = vld [vmem:[#allocation7 + $0x48] sm:$0xff]
    %v577 = vld [vmem:[#allocation7 + $0x50] sm:$0xff]
    %v578 = vld [vmem:[#allocation7 + $0x58] sm:$0xff]
    %v579 = vld [vmem:[#allocation7 + $0x60] sm:$0xff]
    %v580 = vld [vmem:[#allocation7 + $0x68] sm:$0xff]
    %v581 = vld [vmem:[#allocation7 + $0x70] sm:$0xff]
    %v582 = vld [vmem:[#allocation7 + $0x78] sm:$0xff]
    %v583 = vld [vmem:[%s5] sm:$0x1]
    %v585 = vlaneseq
    %v586 = vshrl.u32 %v585, 7
    %v587 = vsub.s32 0, %v586
    %v588 = vrot.slane %v583, %v587
    %590 = vmatprep.subr.mxu0 0.0
    %591 = vmatpush1.msra.mxu0 %v567
    %592 = vmatprep.subr.mxu0 0.0
    %593 = vmatpush1.msra.mxu0 %v568
    %594 = vmatprep.subr.mxu0 0.0
    %595 = vmatpush1.msra.mxu0 %v569
    %596 = vmatprep.subr.mxu0 0.0
    %597 = vmatpush1.msra.mxu0 %v570
    %598 = vmatprep.subr.mxu0 0.0
    %599 = vmatpush1.msra.mxu0 %v571
    %600 = vmatprep.subr.mxu0 0.0
    %601 = vmatpush1.msra.mxu0 %v572
    %602 = vmatprep.subr.mxu0 0.0
    %603 = vmatpush1.msra.mxu0 %v573
    %604 = vmatprep.subr.mxu0 0.0
    %605 = vmatpush1.msra.mxu0 %v574
    %606 = vmatprep.subr.mxu0 0.0
    %607 = vmatpush1.msra.mxu0 %v575
    %608 = vmatprep.subr.mxu0 0.0
    %609 = vmatpush1.msra.mxu0 %v576
    %610 = vmatprep.subr.mxu0 0.0
    %611 = vmatpush1.msra.mxu0 %v577
    %612 = vmatprep.subr.mxu0 0.0
    %613 = vmatpush1.msra.mxu0 %v578
    %614 = vmatprep.subr.mxu0 0.0
    %615 = vmatpush1.msra.mxu0 %v579
    %616 = vmatprep.subr.mxu0 0.0
    %617 = vmatpush1.msra.mxu0 %v580
    %618 = vmatprep.subr.mxu0 0.0
    %619 = vmatpush1.msra.mxu0 %v581
    %620 = vmatprep.subr.mxu0 0.0
    %621 = vmatpush1.msra.mxu0 %v582
    %622 = vmatprep.subr.mxu0 0.0
    %623 = vmatpush1.msra.mxu0 0.0
    %624 = vmatprep.subr.mxu0 0.0
    %625 = vmatpush1.msra.mxu0 0.0
    %626 = vmatprep.subr.mxu0 0.0
    %627 = vmatpush1.msra.mxu0 0.0
    %628 = vmatprep.subr.mxu0 0.0
    %629 = vmatpush1.msra.mxu0 0.0
    %630 = vmatprep.subr.mxu0 0.0
    %631 = vmatpush1.msra.mxu0 0.0
    %632 = vmatprep.subr.mxu0 0.0
    %633 = vmatpush1.msra.mxu0 0.0
    %634 = vmatprep.subr.mxu0 0.0
    %635 = vmatpush1.msra.mxu0 0.0
    %636 = vmatprep.subr.mxu0 0.0
    %637 = vmatpush1.msra.mxu0 0.0
    %638 = vmatprep.subr.mxu0 0.0
    %639 = vmatpush1.msra.mxu0 0.0
    %640 = vmatprep.subr.mxu0 0.0
    %641 = vmatpush1.msra.mxu0 0.0
    %642 = vmatprep.subr.mxu0 0.0
    %643 = vmatpush1.msra.mxu0 0.0
    %644 = vmatprep.subr.mxu0 0.0
    %645 = vmatpush1.msra.mxu0 0.0
    %646 = vmatprep.subr.mxu0 0.0
    %647 = vmatpush1.msra.mxu0 0.0
    %648 = vmatprep.subr.mxu0 0.0
    %649 = vmatpush1.msra.mxu0 0.0
    %650 = vmatprep.subr.mxu0 0.0
    %651 = vmatpush1.msra.mxu0 0.0
    %652 = vmatprep.subr.mxu0 0.0
    %653 = vmatpush1.msra.mxu0 0.0
    %654 = vmatprep.mubr.f32.mxu0 0.0
    %655 = vmatmul.mubr.f32.gmra.mrb[0].mxu0 %v566
    %v656 = vpop.f32.mrb[0].mxu0
    %v657 = vadd.f32 %v588, %v656
    %v658 = vpop.f32.mrb[0].mxu0
    %659 = vdwg.mxu0
    %v660 = vmax.f32 %v657, 0.0
    %v661 = vld [vmem:[#allocation8] sm:$0xff]
    %v662 = vld [vmem:[#allocation8 + $0x8] sm:$0xff]
    %v663 = vld [vmem:[#allocation8 + $0x10] sm:$0xff]
    %v664 = vld [vmem:[#allocation8 + $0x18] sm:$0xff]
    %v665 = vld [vmem:[#allocation8 + $0x20] sm:$0xff]
    %v666 = vld [vmem:[#allocation8 + $0x28] sm:$0xff]
    %v667 = vld [vmem:[#allocation8 + $0x30] sm:$0xff]
    %v668 = vld [vmem:[#allocation8 + $0x38] sm:$0xff]
    %v669 = vld [vmem:[#allocation8 + $0x40] sm:$0xff]
    %v670 = vld [vmem:[#allocation8 + $0x48] sm:$0xff]
    %v671 = vld [vmem:[#allocation8 + $0x50] sm:$0xff]
    %v672 = vld [vmem:[#allocation8 + $0x58] sm:$0xff]
    %v673 = vld [vmem:[#allocation8 + $0x60] sm:$0xff]
    %v674 = vld [vmem:[#allocation8 + $0x68] sm:$0xff]
    %v675 = vld [vmem:[#allocation8 + $0x70] sm:$0xff]
    %v676 = vld [vmem:[#allocation8 + $0x78] sm:$0xff]
    %v677 = vld [vmem:[%s7] sm:$0x1]
    %v679 = vlaneseq
    %v680 = vshrl.u32 %v679, 7
    %v681 = vsub.s32 0, %v680
    %v682 = vrot.slane %v677, %v681
    %684 = vmatprep.subr.mxu0 0.0
    %685 = vmatpush1.msra.mxu0 %v661
    %686 = vmatprep.subr.mxu0 0.0
    %687 = vmatpush1.msra.mxu0 %v662
    %688 = vmatprep.subr.mxu0 0.0
    %689 = vmatpush1.msra.mxu0 %v663
    %690 = vmatprep.subr.mxu0 0.0
    %691 = vmatpush1.msra.mxu0 %v664
    %692 = vmatprep.subr.mxu0 0.0
    %693 = vmatpush1.msra.mxu0 %v665
    %694 = vmatprep.subr.mxu0 0.0
    %695 = vmatpush1.msra.mxu0 %v666
    %696 = vmatprep.subr.mxu0 0.0
    %697 = vmatpush1.msra.mxu0 %v667
    %698 = vmatprep.subr.mxu0 0.0
    %699 = vmatpush1.msra.mxu0 %v668
    %700 = vmatprep.subr.mxu0 0.0
    %701 = vmatpush1.msra.mxu0 %v669
    %702 = vmatprep.subr.mxu0 0.0
    %703 = vmatpush1.msra.mxu0 %v670
    %704 = vmatprep.subr.mxu0 0.0
    %705 = vmatpush1.msra.mxu0 %v671
    %706 = vmatprep.subr.mxu0 0.0
    %707 = vmatpush1.msra.mxu0 %v672
    %708 = vmatprep.subr.mxu0 0.0
    %709 = vmatpush1.msra.mxu0 %v673
    %710 = vmatprep.subr.mxu0 0.0
    %711 = vmatpush1.msra.mxu0 %v674
    %712 = vmatprep.subr.mxu0 0.0
    %713 = vmatpush1.msra.mxu0 %v675
    %714 = vmatprep.subr.mxu0 0.0
    %715 = vmatpush1.msra.mxu0 %v676
    %716 = vmatprep.subr.mxu0 0.0
    %717 = vmatpush1.msra.mxu0 0.0
    %718 = vmatprep.subr.mxu0 0.0
    %719 = vmatpush1.msra.mxu0 0.0
    %720 = vmatprep.subr.mxu0 0.0
    %721 = vmatpush1.msra.mxu0 0.0
    %722 = vmatprep.subr.mxu0 0.0
    %723 = vmatpush1.msra.mxu0 0.0
    %724 = vmatprep.subr.mxu0 0.0
    %725 = vmatpush1.msra.mxu0 0.0
    %726 = vmatprep.subr.mxu0 0.0
    %727 = vmatpush1.msra.mxu0 0.0
    %728 = vmatprep.subr.mxu0 0.0
    %729 = vmatpush1.msra.mxu0 0.0
    %730 = vmatprep.subr.mxu0 0.0
    %731 = vmatpush1.msra.mxu0 0.0
    %732 = vmatprep.subr.mxu0 0.0
    %733 = vmatpush1.msra.mxu0 0.0
    %734 = vmatprep.subr.mxu0 0.0
    %735 = vmatpush1.msra.mxu0 0.0
    %736 = vmatprep.subr.mxu0 0.0
    %737 = vmatpush1.msra.mxu0 0.0
    %738 = vmatprep.subr.mxu0 0.0
    %739 = vmatpush1.msra.mxu0 0.0
    %740 = vmatprep.subr.mxu0 0.0
    %741 = vmatpush1.msra.mxu0 0.0
    %742 = vmatprep.subr.mxu0 0.0
    %743 = vmatpush1.msra.mxu0 0.0
    %744 = vmatprep.subr.mxu0 0.0
    %745 = vmatpush1.msra.mxu0 0.0
    %746 = vmatprep.subr.mxu0 0.0
    %747 = vmatpush1.msra.mxu0 0.0
    %748 = vmatprep.mubr.f32.mxu0 0.0
    %749 = vmatmul.mubr.f32.gmra.mrb[0].mxu0 %v660
    %v750 = vpop.f32.mrb[0].mxu0
    %v751 = vadd.f32 %v682, %v750
    %v752 = vpop.f32.mrb[0].mxu0
    %753 = vdwg.mxu0
    %v754 = vmax.f32 %v751, 0.0
    %v755 = vld [vmem:[#allocation10] sm:$0xff]
    %v756 = vld [vmem:[#allocation10 + $0x8] sm:$0xff]
    %v757 = vld [vmem:[#allocation10 + $0x10] sm:$0xff]
    %v758 = vld [vmem:[#allocation10 + $0x18] sm:$0xff]
    %v759 = vld [vmem:[#allocation10 + $0x20] sm:$0xff]
    %v760 = vld [vmem:[#allocation10 + $0x28] sm:$0xff]
    %v761 = vld [vmem:[#allocation10 + $0x30] sm:$0xff]
    %v762 = vld [vmem:[#allocation10 + $0x38] sm:$0xff]
    %v763 = vld [vmem:[#allocation10 + $0x40] sm:$0xff]
    %v764 = vld [vmem:[#allocation10 + $0x48] sm:$0xff]
    %v765 = vld [vmem:[#allocation10 + $0x50] sm:$0xff]
    %v766 = vld [vmem:[#allocation10 + $0x58] sm:$0xff]
    %v767 = vld [vmem:[#allocation10 + $0x60] sm:$0xff]
    %v768 = vld [vmem:[#allocation10 + $0x68] sm:$0xff]
    %v769 = vld [vmem:[#allocation10 + $0x70] sm:$0xff]
    %v770 = vld [vmem:[#allocation10 + $0x78] sm:$0xff]
    %v771 = vld [vmem:[%s9] sm:$0x1]
    %v773 = vlaneseq
    %v774 = vshrl.u32 %v773, 7
    %v775 = vsub.s32 0, %v774
    %v776 = vrot.slane %v771, %v775
    %778 = vmatprep.subr.mxu0 0.0
    %779 = vmatpush1.msra.mxu0 %v755
    %780 = vmatprep.subr.mxu0 0.0
    %781 = vmatpush1.msra.mxu0 %v756
    %782 = vmatprep.subr.mxu0 0.0
    %783 = vmatpush1.msra.mxu0 %v757
    %784 = vmatprep.subr.mxu0 0.0
    %785 = vmatpush1.msra.mxu0 %v758
    %786 = vmatprep.subr.mxu0 0.0
    %787 = vmatpush1.msra.mxu0 %v759
    %788 = vmatprep.subr.mxu0 0.0
    %789 = vmatpush1.msra.mxu0 %v760
    %790 = vmatprep.subr.mxu0 0.0
    %791 = vmatpush1.msra.mxu0 %v761
    %792 = vmatprep.subr.mxu0 0.0
    %793 = vmatpush1.msra.mxu0 %v762
    %794 = vmatprep.subr.mxu0 0.0
    %795 = vmatpush1.msra.mxu0 %v763
    %796 = vmatprep.subr.mxu0 0.0
    %797 = vmatpush1.msra.mxu0 %v764
    %798 = vmatprep.subr.mxu0 0.0
    %799 = vmatpush1.msra.mxu0 %v765
    %800 = vmatprep.subr.mxu0 0.0
    %801 = vmatpush1.msra.mxu0 %v766
    %802 = vmatprep.subr.mxu0 0.0
    %803 = vmatpush1.msra.mxu0 %v767
    %804 = vmatprep.subr.mxu0 0.0
    %805 = vmatpush1.msra.mxu0 %v768
    %806 = vmatprep.subr.mxu0 0.0
    %807 = vmatpush1.msra.mxu0 %v769
    %808 = vmatprep.subr.mxu0 0.0
    %809 = vmatpush1.msra.mxu0 %v770
    %810 = vmatprep.subr.mxu0 0.0
    %811 = vmatpush1.msra.mxu0 0.0
    %812 = vmatprep.subr.mxu0 0.0
    %813 = vmatpush1.msra.mxu0 0.0
    %814 = vmatprep.subr.mxu0 0.0
    %815 = vmatpush1.msra.mxu0 0.0
    %816 = vmatprep.subr.mxu0 0.0
    %817 = vmatpush1.msra.mxu0 0.0
    %818 = vmatprep.subr.mxu0 0.0
    %819 = vmatpush1.msra.mxu0 0.0
    %820 = vmatprep.subr.mxu0 0.0
    %821 = vmatpush1.msra.mxu0 0.0
    %822 = vmatprep.subr.mxu0 0.0
    %823 = vmatpush1.msra.mxu0 0.0
    %824 = vmatprep.subr.mxu0 0.0
    %825 = vmatpush1.msra.mxu0 0.0
    %826 = vmatprep.subr.mxu0 0.0
    %827 = vmatpush1.msra.mxu0 0.0
    %828 = vmatprep.subr.mxu0 0.0
    %829 = vmatpush1.msra.mxu0 0.0
    %830 = vmatprep.subr.mxu0 0.0
    %831 = vmatpush1.msra.mxu0 0.0
    %832 = vmatprep.subr.mxu0 0.0
    %833 = vmatpush1.msra.mxu0 0.0
    %834 = vmatprep.subr.mxu0 0.0
    %835 = vmatpush1.msra.mxu0 0.0
    %836 = vmatprep.subr.mxu0 0.0
    %837 = vmatpush1.msra.mxu0 0.0
    %838 = vmatprep.subr.mxu0 0.0
    %839 = vmatpush1.msra.mxu0 0.0
    %840 = vmatprep.subr.mxu0 0.0
    %841 = vmatpush1.msra.mxu0 0.0
    %842 = vmatprep.mubr.f32.mxu0 0.0
    %843 = vmatmul.mubr.f32.gmra.mrb[0].mxu0 %v754
    %v844 = vpop.f32.mrb[0].mxu0
    %v845 = vadd.f32 %v776, %v844
    %v846 = vpop.f32.mrb[0].mxu0
    %847 = vdwg.mxu0
    %v848 = vlaneseq
    %v849 = vand.u32 %v848, 127
    %vm850 = vcmp.lt.s32.totalorder %v849, 32
    %vm851 = vcmp.ge.s32.totalorder %v849, 32
    %vm852 = vcmp.lt.s32.totalorder %v849, 64
    %vm853 = vmand %vm851, %vm852
    %v854 = vsel %vm853, %v845, 0.0
    %v855 = vmul.f32 %v854, 1.442695
    %v856 = vpow.pop %v855
    %v857 = vsel %vm850, %v845, 0.0
    %v858 = vld [vmem:[%s1] sm:$0x3]
    %v859 = vmul.f32 %v856, %v858
    %v860 = vadd.f32 %v857, %v859
    %861 = vst [vmem:[#allocation11] sm:$0x3] %v860
    %v862 = vlaneseq
    %v863 = vshrl.u32 %v862, 7
    %s864 = smul.u32 0, 2
    %v865 = vstv %s864
    %v866 = vadd.s32 %v863, %v865
    %vm867 = vcmp.lt.s32.totalorder %v866, 2
    %vm868 = vmand %vm850, %vm867
    %v869 = vmul.f32 %v845, %v845
    %v870 = vsel %vm868, %v869, 0.0
    %vm871 = vmand %vm853, %vm867
    %v872 = vmul.f32 %v856, %v856
    %v873 = vsub.f32 %v872, %v845
    %v874 = vsub.f32 %v873, 0.5
    %v875 = vsel %vm871, %v874, 0.0
    %v876 = vadd.f32 %v870, %v875
    %vm877 = vcmask 1041408
    %v878 = vsel %vm877, %v876, 0.0
    %879 = vadd.xlane.f32.xlu0 %v878
    %v880 = vpop.xlane.xlu0 %879
    %v881 = vrot.slane %v880, 4
    %v882 = vadd.f32 %v880, %v881
    %v883 = vrot.slane %v882, 2
    %v884 = vadd.f32 %v882, %v883
    %v885 = vrot.slane %v884, 1
    %v886 = vadd.f32 %v884, %v885
    %s887 = vtos %v886
    %v888 = vstv %s887
    %v889 = vadd.f32 %v888, 0.0
    %890 = vst [vmem:[#allocation12] sm:$0xff] %v889
    // Predicated region
    $region62: #{tpu_custom_call.1} parent=1 // pred_check
      _
    $region63: #{tpu_custom_call.1} parent=1 // pred_check_branch
      %892 = sbr.rel (0) target = $region65
    $region64: #{tpu_custom_call.1} parent=1 // pred_region
      %s894 = ssub.s32 32, 32
      %895 = vsyncadd [#allocation4], %s894
      %s897 = sshll.u32 [#allocation11], 4
      %s898 = int_to_ptr.vmem [resolvable:$true] %s897
      %900 = dma.vmem_to_hbm [thread:$0]  %s898, 32, %s10, [#allocation4]
    $region65: #{tpu_custom_call.1} parent=1 // pred_fallthru
      _
    // Predicated region
    $region66: #{tpu_custom_call.1} parent=1 // pred_check
      _
    $region67: #{tpu_custom_call.1} parent=1 // pred_check_branch
      %902 = sbr.rel (0) target = $region69
    $region68: #{tpu_custom_call.1} parent=1 // pred_region
      %s904 = ssub.s32 128, 128
      %905 = vsyncadd [#allocation13], %s904
      %s907 = sshll.u32 [#allocation12], 4
      %s908 = int_to_ptr.vmem [resolvable:$true] %s907
      %910 = dma.vmem_to_hbm [thread:$0]  %s908, 128, %s11, [#allocation13]
    $region69: #{tpu_custom_call.1} parent=1 // pred_fallthru
      _
    // Predicated region
    $region70: #{tpu_custom_call.1} parent=1 // pred_check
      _
    $region71: #{tpu_custom_call.1} parent=1 // pred_check_branch
      %912 = sbr.rel (0) target = $region73
    $region72: #{tpu_custom_call.1} parent=1 // pred_region
      %913 = dma.done [#allocation4], 32
    $region73: #{tpu_custom_call.1} parent=1 // pred_fallthru
      _
    // Predicated region
    $region74: #{tpu_custom_call.1} parent=1 // pred_check
      _
    $region75: #{tpu_custom_call.1} parent=1 // pred_check_branch
      %915 = sbr.rel (0) target = $region77
    $region76: #{tpu_custom_call.1} parent=1 // pred_region
      %916 = dma.done [#allocation13], 128
    $region77: #{tpu_custom_call.1} parent=1 // pred_fallthru
      _
    %917 = vsyncpa [#allocation3], 1
    %918 = vsyncpa [#allocation6], 1
    %919 = vsyncpa [#allocation9], 1
    %920 = vsyncpa [#allocation4], 1
    %921 = vsyncpa [#allocation13], 1

</llo_original>
